<compile_context>
chip_gen: v7x
topology: tpu7x:2x2x1
jax: 0.10.0
libtpu: 0.0.40
codegen_flags: <defaults>
</compile_context>

<pallas_src>
import functools

import jax
import jax.numpy as jnp
from jax.experimental import pallas as pl
from jax.experimental.pallas import tpu as pltpu


def _make_fam_kernel(H, W, C):
    HW = H * W
    Cin = 2 * C

    def kernel(x1_ref, x2_ref, w_ref, b_ref, m_ref, o_ref, col_ref):
        # x1_ref, x2_ref: (1, C, HW)      NCHW inputs, spatial flattened onto lanes
        # w_ref:          (Cout, 9*Cin)   tap-major flattened 3x3 weights
        # b_ref:          (Cout, 1)       bias (f32)
        # m_ref:          (2, HW)         row 0: (w != 0), row 1: (w != W-1)
        # o_ref:          (1, Cout, HW)   output
        # col_ref:        (9*Cin, HW)     im2col scratch
        dt = col_ref.dtype

        # Build the im2col slab: one shifted (Cin, HW-|s|) copy per tap.
        for kh in range(3):
            for kw in range(3):
                t = kh * 3 + kw
                s = (kh - 1) * W + (kw - 1)      # flat lane shift for this tap
                lo = max(0, -s)                  # valid output columns [lo, hi)
                hi = min(HW, HW - s)
                row = t * Cin

                x1s = x1_ref[0, :, lo + s:hi + s]
                x2s = x2_ref[0, :, lo + s:hi + s]
                if kw == 0:                      # reads w-1: kill w == 0 columns
                    m = m_ref[0:1, lo:hi]
                    x1s = x1s * m
                    x2s = x2s * m
                elif kw == 2:                    # reads w+1: kill w == W-1 columns
                    m = m_ref[1:2, lo:hi]
                    x1s = x1s * m
                    x2s = x2s * m

                col_ref[row:row + C, lo:hi] = x1s
                col_ref[row + C:row + Cin, lo:hi] = x2s
                # Out-of-image rows (top/bottom 'same' padding): tiny static zero margins.
                if lo > 0:
                    col_ref[row:row + Cin, 0:lo] = jnp.zeros((Cin, lo), dt)
                if hi < HW:
                    col_ref[row:row + Cin, hi:HW] = jnp.zeros((Cin, HW - hi), dt)

        # Single large-K MXU matmul: (Cout, 9*Cin) @ (9*Cin, HW).
        acc = jnp.dot(w_ref[...], col_ref[...], preferred_element_type=jnp.float32)
        o_ref[0] = (acc + b_ref[...]).astype(o_ref.dtype)

    return kernel


@functools.partial(jax.jit, static_argnames=("compute_dtype",))
def fam_forward(x1_nchw, x2_nchw, weight_oihw, bias, *, compute_dtype=None):
    """FAM forward: 3x3 'same' conv (bias, no relu) of cat([x1, x2], dim=1).

    x1_nchw, x2_nchw: (B, C, H, W)
    weight_oihw:      (C, 2C, 3, 3)   (PyTorch Conv2d OIHW layout)
    bias:             (C,)
    compute_dtype:    optional dtype for activations/weights (e.g. bf16 on v6e/v7x)
    returns:          (B, C, H, W)
    """
    B, C, H, W = x1_nchw.shape
    Cin, Cout = 2 * C, C
    HW = H * W
    out_dtype = x1_nchw.dtype
    cdt = jnp.dtype(compute_dtype) if compute_dtype is not None else jnp.dtype(out_dtype)

    # Free contiguous reshapes (no HBM relayout); concat/pad/im2col happen in-kernel.
    x1f = x1_nchw.reshape(B, C, HW).astype(cdt)
    x2f = x2_nchw.reshape(B, C, HW).astype(cdt)
    # w_flat[o, (kh*3+kw)*Cin + ci] = weight[o, ci, kh, kw]  (matches im2col row order)
    w_flat = jnp.transpose(weight_oihw, (0, 2, 3, 1)).reshape(Cout, 9 * Cin).astype(cdt)
    b2 = bias.reshape(Cout, 1).astype(jnp.float32)

    # W-wrap masks hoisted out of the per-step kernel body.
    col = jnp.arange(HW, dtype=jnp.int32) % W
    masks = jnp.stack([(col != 0), (col != W - 1)]).astype(cdt)      # (2, HW)

    itemsize = cdt.itemsize
    block_bytes = 2 * C * HW * itemsize + Cout * HW * jnp.dtype(out_dtype).itemsize
    const_bytes = (Cout * 9 * Cin + 2 * HW) * itemsize + Cout * 4
    scratch_bytes = 9 * Cin * HW * itemsize
    vmem_needed = 2 * block_bytes + const_bytes + scratch_bytes      # 2x = double-buffered blocks
    vmem_limit = int(min(max(2 * vmem_needed, 16 * 1024 * 1024), 48 * 1024 * 1024))

    # TODO(synk): for large C*H*W (v7x 64 MiB VMEM), add an H-tile grid axis with a
    # +-1 row halo (manual DMA / pl.Element) and mark it "parallel" as well.
    out_flat = pl.pallas_call(
        _make_fam_kernel(H, W, C),
        out_shape=jax.ShapeDtypeStruct((B, Cout, HW), out_dtype),
        grid_spec=pltpu.PrefetchScalarGridSpec(
            num_scalar_prefetch=0,
            grid=(B,),
            in_specs=[
                pl.BlockSpec((1, C, HW), lambda b: (b, 0, 0)),
                pl.BlockSpec((1, C, HW), lambda b: (b, 0, 0)),
                pl.BlockSpec((Cout, 9 * Cin), lambda b: (0, 0)),
                pl.BlockSpec((Cout, 1), lambda b: (0, 0)),
                pl.BlockSpec((2, HW), lambda b: (0, 0)),
            ],
            out_specs=pl.BlockSpec((1, Cout, HW), lambda b: (b, 0, 0)),
            scratch_shapes=[pltpu.VMEM((9 * Cin, HW), cdt)],
        ),
        compiler_params=pltpu.CompilerParams(
            dimension_semantics=("parallel",),
            vmem_limit_bytes=vmem_limit,
        ),
    )(x1f, x2f, w_flat, b2, masks)

    return out_flat.reshape(B, Cout, H, W)


if __name__ == "__main__":
    key = jax.random.PRNGKey(0)
    k1, k2, kw, kb = jax.random.split(key, 4)

    B, C, H, W = 2, 4, 16, 16
    x1 = jax.random.normal(k1, (B, C, H, W), dtype=jnp.float32)
    x2 = jax.random.normal(k2, (B, C, H, W), dtype=jnp.float32)

    # Conv2d(2C, C, kernel_size=3, padding=1) parameters, PyTorch OIHW layout.
    weight = 0.1 * jax.random.normal(kw, (C, 2 * C, 3, 3), dtype=jnp.float32)
    bias = 0.01 * jax.random.normal(kb, (C,), dtype=jnp.float32)

    out = jax.block_until_ready(fam_forward(x1, x2, weight, bias))
    assert out.shape == (B, C, H, W)

    # Pure-JAX reference: concat + 3x3 'same' conv + bias.
    xcat = jnp.concatenate([x1, x2], axis=1)
    ref = jax.lax.conv_general_dilated(
        xcat, weight, window_strides=(1, 1), padding=((1, 1), (1, 1)),
        dimension_numbers=("NCHW", "OIHW", "NCHW"),
    ) + bias.reshape(1, C, 1, 1)
    assert jnp.allclose(out, ref, atol=1e-3, rtol=1e-3), float(
        jnp.max(jnp.abs(out - ref)))

    print("KERNEL_OK")
</pallas_src>

<mosaic_0001>
module attributes {stable_mosaic.version = 11 : i64} {
  func.func @kernel(%arg0: i32, %arg1: memref<1x4x256xf32, #tpu.memory_space<vmem>>, %arg2: memref<1x4x256xf32, #tpu.memory_space<vmem>>, %arg3: memref<4x72xf32, #tpu.memory_space<vmem>>, %arg4: memref<4x1xf32, #tpu.memory_space<vmem>>, %arg5: memref<2x256xf32, #tpu.memory_space<vmem>>, %arg6: memref<1x4x256xf32, #tpu.memory_space<vmem>>, %arg7: memref<72x256xf32, #tpu.memory_space<vmem>>) attributes {dimension_semantics = [#tpu.dimension_semantics<parallel>], iteration_bounds = array<i64: 2>, scalar_prefetch = 0 : i64, scratch_operands = 1 : i64, tpu.core_type = #tpu.core_type<tc>, window_params = [{transform_indices = @transform_0, window_bounds = array<i64: 1, 4, 256>}, {transform_indices = @transform_1, window_bounds = array<i64: 1, 4, 256>}, {pipeline_mode = #tpu.pipeline_mode<synchronous>, transform_indices = @transform_2, window_bounds = array<i64: 4, 72>}, {pipeline_mode = #tpu.pipeline_mode<synchronous>, transform_indices = @transform_3, window_bounds = array<i64: 4, 1>}, {pipeline_mode = #tpu.pipeline_mode<synchronous>, transform_indices = @transform_4, window_bounds = array<i64: 2, 256>}, {transform_indices = @transform_5, window_bounds = array<i64: 1, 4, 256>}]} {
    %c0 = arith.constant 0 : index
    %c0_0 = arith.constant 0 : index
    %c0_1 = arith.constant 0 : index
    %0 = vector.load %arg1[%c0, %c0_0, %c0_1] : memref<1x4x256xf32, #tpu.memory_space<vmem>>, vector<1x4x239xf32>
    %1 = vector.shape_cast %0 : vector<1x4x239xf32> to vector<4x239xf32>
    %c0_2 = arith.constant 0 : index
    %c0_3 = arith.constant 0 : index
    %c0_4 = arith.constant 0 : index
    %2 = vector.load %arg2[%c0_2, %c0_3, %c0_4] : memref<1x4x256xf32, #tpu.memory_space<vmem>>, vector<1x4x239xf32>
    %3 = vector.shape_cast %2 : vector<1x4x239xf32> to vector<4x239xf32>
    %c0_5 = arith.constant 0 : index
    %c17 = arith.constant 17 : index
    %4 = vector.load %arg5[%c0_5, %c17] : memref<2x256xf32, #tpu.memory_space<vmem>>, vector<1x239xf32>
    %5 = vector.broadcast %4 : vector<1x239xf32> to vector<4x239xf32>
    %6 = arith.mulf %1, %5 : vector<4x239xf32>
    %7 = vector.broadcast %4 : vector<1x239xf32> to vector<4x239xf32>
    %8 = arith.mulf %3, %7 : vector<4x239xf32>
    %c0_6 = arith.constant 0 : index
    %c17_7 = arith.constant 17 : index
    %9 = vector.load %arg7[%c0_6, %c17_7] : memref<72x256xf32, #tpu.memory_space<vmem>>, vector<4x239xf32>
    tpu.vector_store %arg7[%c0_6, %c17_7], %6 {strides = array<i32>} : memref<72x256xf32, #tpu.memory_space<vmem>>, vector<4x239xf32>,
    %c4 = arith.constant 4 : index
    %c17_8 = arith.constant 17 : index
    %10 = vector.load %arg7[%c4, %c17_8] : memref<72x256xf32, #tpu.memory_space<vmem>>, vector<4x239xf32>
    tpu.vector_store %arg7[%c4, %c17_8], %8 {strides = array<i32>} : memref<72x256xf32, #tpu.memory_space<vmem>>, vector<4x239xf32>,
    %cst = arith.constant 0.000000e+00 : f32
    %11 = vector.broadcast %cst : f32 to vector<8x17xf32>
    %c0_9 = arith.constant 0 : index
    %c0_10 = arith.constant 0 : index
    %12 = vector.load %arg7[%c0_9, %c0_10] : memref<72x256xf32, #tpu.memory_space<vmem>>, vector<8x17xf32>
    tpu.vector_store %arg7[%c0_9, %c0_10], %11 {strides = array<i32>} : memref<72x256xf32, #tpu.memory_space<vmem>>, vector<8x17xf32>,
    %c0_11 = arith.constant 0 : index
    %c0_12 = arith.constant 0 : index
    %c0_13 = arith.constant 0 : index
    %13 = vector.load %arg1[%c0_11, %c0_12, %c0_13] : memref<1x4x256xf32, #tpu.memory_space<vmem>>, vector<1x4x240xf32>
    %14 = vector.shape_cast %13 : vector<1x4x240xf32> to vector<4x240xf32>
    %c0_14 = arith.constant 0 : index
    %c0_15 = arith.constant 0 : index
    %c0_16 = arith.constant 0 : index
    %15 = vector.load %arg2[%c0_14, %c0_15, %c0_16] : memref<1x4x256xf32, #tpu.memory_space<vmem>>, vector<1x4x240xf32>
    %16 = vector.shape_cast %15 : vector<1x4x240xf32> to vector<4x240xf32>
    %c8 = arith.constant 8 : index
    %c16 = arith.constant 16 : index
    %17 = vector.load %arg7[%c8, %c16] : memref<72x256xf32, #tpu.memory_space<vmem>>, vector<4x240xf32>
    tpu.vector_store %arg7[%c8, %c16], %14 {strides = array<i32>} : memref<72x256xf32, #tpu.memory_space<vmem>>, vector<4x240xf32>,
    %c12 = arith.constant 12 : index
    %c16_17 = arith.constant 16 : index
    %18 = vector.load %arg7[%c12, %c16_17] : memref<72x256xf32, #tpu.memory_space<vmem>>, vector<4x240xf32>
    tpu.vector_store %arg7[%c12, %c16_17], %16 {strides = array<i32>} : memref<72x256xf32, #tpu.memory_space<vmem>>, vector<4x240xf32>,
    %cst_18 = arith.constant 0.000000e+00 : f32
    %19 = vector.broadcast %cst_18 : f32 to vector<8x16xf32>
    %c8_19 = arith.constant 8 : index
    %c0_20 = arith.constant 0 : index
    %20 = vector.load %arg7[%c8_19, %c0_20] : memref<72x256xf32, #tpu.memory_space<vmem>>, vector<8x16xf32>
    tpu.vector_store %arg7[%c8_19, %c0_20], %19 {strides = array<i32>} : memref<72x256xf32, #tpu.memory_space<vmem>>, vector<8x16xf32>,
    %c0_21 = arith.constant 0 : index
    %c0_22 = arith.constant 0 : index
    %c0_23 = arith.constant 0 : index
    %21 = vector.load %arg1[%c0_21, %c0_22, %c0_23] : memref<1x4x256xf32, #tpu.memory_space<vmem>>, vector<1x4x241xf32>
    %22 = vector.shape_cast %21 : vector<1x4x241xf32> to vector<4x241xf32>
    %c0_24 = arith.constant 0 : index
    %c0_25 = arith.constant 0 : index
    %c0_26 = arith.constant 0 : index
    %23 = vector.load %arg2[%c0_24, %c0_25, %c0_26] : memref<1x4x256xf32, #tpu.memory_space<vmem>>, vector<1x4x241xf32>
    %24 = vector.shape_cast %23 : vector<1x4x241xf32> to vector<4x241xf32>
    %c1 = arith.constant 1 : index
    %c15 = arith.constant 15 : index
    %25 = vector.load %arg5[%c1, %c15] : memref<2x256xf32, #tpu.memory_space<vmem>>, vector<1x241xf32>
    %26 = vector.broadcast %25 : vector<1x241xf32> to vector<4x241xf32>
    %27 = arith.mulf %22, %26 : vector<4x241xf32>
    %28 = vector.broadcast %25 : vector<1x241xf32> to vector<4x241xf32>
    %29 = arith.mulf %24, %28 : vector<4x241xf32>
    %c16_27 = arith.constant 16 : index
    %c15_28 = arith.constant 15 : index
    %30 = vector.load %arg7[%c16_27, %c15_28] : memref<72x256xf32, #tpu.memory_space<vmem>>, vector<4x241xf32>
    tpu.vector_store %arg7[%c16_27, %c15_28], %27 {strides = array<i32>} : memref<72x256xf32, #tpu.memory_space<vmem>>, vector<4x241xf32>,
    %c20 = arith.constant 20 : index
    %c15_29 = arith.constant 15 : index
    %31 = vector.load %arg7[%c20, %c15_29] : memref<72x256xf32, #tpu.memory_space<vmem>>, vector<4x241xf32>
    tpu.vector_store %arg7[%c20, %c15_29], %29 {strides = array<i32>} : memref<72x256xf32, #tpu.memory_space<vmem>>, vector<4x241xf32>,
    %cst_30 = arith.constant 0.000000e+00 : f32
    %32 = vector.broadcast %cst_30 : f32 to vector<8x15xf32>
    %c16_31 = arith.constant 16 : index
    %c0_32 = arith.constant 0 : index
    %33 = vector.load %arg7[%c16_31, %c0_32] : memref<72x256xf32, #tpu.memory_space<vmem>>, vector<8x15xf32>
    tpu.vector_store %arg7[%c16_31, %c0_32], %32 {strides = array<i32>} : memref<72x256xf32, #tpu.memory_space<vmem>>, vector<8x15xf32>,
    %c0_33 = arith.constant 0 : index
    %c0_34 = arith.constant 0 : index
    %c0_35 = arith.constant 0 : index
    %34 = vector.load %arg1[%c0_33, %c0_34, %c0_35] : memref<1x4x256xf32, #tpu.memory_space<vmem>>, vector<1x4x255xf32>
    %35 = vector.shape_cast %34 : vector<1x4x255xf32> to vector<4x255xf32>
    %c0_36 = arith.constant 0 : index
    %c0_37 = arith.constant 0 : index
    %c0_38 = arith.constant 0 : index
    %36 = vector.load %arg2[%c0_36, %c0_37, %c0_38] : memref<1x4x256xf32, #tpu.memory_space<vmem>>, vector<1x4x255xf32>
    %37 = vector.shape_cast %36 : vector<1x4x255xf32> to vector<4x255xf32>
    %c0_39 = arith.constant 0 : index
    %c1_40 = arith.constant 1 : index
    %38 = vector.load %arg5[%c0_39, %c1_40] : memref<2x256xf32, #tpu.memory_space<vmem>>, vector<1x255xf32>
    %39 = vector.broadcast %38 : vector<1x255xf32> to vector<4x255xf32>
    %40 = arith.mulf %35, %39 : vector<4x255xf32>
    %41 = vector.broadcast %38 : vector<1x255xf32> to vector<4x255xf32>
    %42 = arith.mulf %37, %41 : vector<4x255xf32>
    %c24 = arith.constant 24 : index
    %c1_41 = arith.constant 1 : index
    %43 = vector.load %arg7[%c24, %c1_41] : memref<72x256xf32, #tpu.memory_space<vmem>>, vector<4x255xf32>
    tpu.vector_store %arg7[%c24, %c1_41], %40 {strides = array<i32>} : memref<72x256xf32, #tpu.memory_space<vmem>>, vector<4x255xf32>,
    %c28 = arith.constant 28 : index
    %c1_42 = arith.constant 1 : index
    %44 = vector.load %arg7[%c28, %c1_42] : memref<72x256xf32, #tpu.memory_space<vmem>>, vector<4x255xf32>
    tpu.vector_store %arg7[%c28, %c1_42], %42 {strides = array<i32>} : memref<72x256xf32, #tpu.memory_space<vmem>>, vector<4x255xf32>,
    %cst_43 = arith.constant 0.000000e+00 : f32
    %45 = vector.broadcast %cst_43 : f32 to vector<8x1xf32>
    %c24_44 = arith.constant 24 : index
    %c0_45 = arith.constant 0 : index
    %46 = vector.load %arg7[%c24_44, %c0_45] : memref<72x256xf32, #tpu.memory_space<vmem>>, vector<8x1xf32>
    tpu.vector_store %arg7[%c24_44, %c0_45], %45 {strides = array<i32>} : memref<72x256xf32, #tpu.memory_space<vmem>>, vector<8x1xf32>,
    %c0_46 = arith.constant 0 : index
    %c0_47 = arith.constant 0 : index
    %c0_48 = arith.constant 0 : index
    %47 = vector.load %arg1[%c0_46, %c0_47, %c0_48] : memref<1x4x256xf32, #tpu.memory_space<vmem>>, vector<1x4x256xf32>
    %48 = vector.shape_cast %47 : vector<1x4x256xf32> to vector<4x256xf32>
    %c0_49 = arith.constant 0 : index
    %c0_50 = arith.constant 0 : index
    %c0_51 = arith.constant 0 : index
    %49 = vector.load %arg2[%c0_49, %c0_50, %c0_51] : memref<1x4x256xf32, #tpu.memory_space<vmem>>, vector<1x4x256xf32>
    %50 = vector.shape_cast %49 : vector<1x4x256xf32> to vector<4x256xf32>
    %c32 = arith.constant 32 : index
    %c0_52 = arith.constant 0 : index
    %51 = vector.load %arg7[%c32, %c0_52] : memref<72x256xf32, #tpu.memory_space<vmem>>, vector<4x256xf32>
    tpu.vector_store %arg7[%c32, %c0_52], %48 {strides = array<i32>} : memref<72x256xf32, #tpu.memory_space<vmem>>, vector<4x256xf32>,
    %c36 = arith.constant 36 : index
    %c0_53 = arith.constant 0 : index
    %52 = vector.load %arg7[%c36, %c0_53] : memref<72x256xf32, #tpu.memory_space<vmem>>, vector<4x256xf32>
    tpu.vector_store %arg7[%c36, %c0_53], %50 {strides = array<i32>} : memref<72x256xf32, #tpu.memory_space<vmem>>, vector<4x256xf32>,
    %c0_54 = arith.constant 0 : index
    %c0_55 = arith.constant 0 : index
    %c1_56 = arith.constant 1 : index
    %53 = vector.load %arg1[%c0_54, %c0_55, %c1_56] : memref<1x4x256xf32, #tpu.memory_space<vmem>>, vector<1x4x255xf32>
    %54 = vector.shape_cast %53 : vector<1x4x255xf32> to vector<4x255xf32>
    %c0_57 = arith.constant 0 : index
    %c0_58 = arith.constant 0 : index
    %c1_59 = arith.constant 1 : index
    %55 = vector.load %arg2[%c0_57, %c0_58, %c1_59] : memref<1x4x256xf32, #tpu.memory_space<vmem>>, vector<1x4x255xf32>
    %56 = vector.shape_cast %55 : vector<1x4x255xf32> to vector<4x255xf32>
    %c1_60 = arith.constant 1 : index
    %c0_61 = arith.constant 0 : index
    %57 = vector.load %arg5[%c1_60, %c0_61] : memref<2x256xf32, #tpu.memory_space<vmem>>, vector<1x255xf32>
    %58 = vector.broadcast %57 : vector<1x255xf32> to vector<4x255xf32>
    %59 = arith.mulf %54, %58 : vector<4x255xf32>
    %60 = vector.broadcast %57 : vector<1x255xf32> to vector<4x255xf32>
    %61 = arith.mulf %56, %60 : vector<4x255xf32>
    %c40 = arith.constant 40 : index
    %c0_62 = arith.constant 0 : index
    %62 = vector.load %arg7[%c40, %c0_62] : memref<72x256xf32, #tpu.memory_space<vmem>>, vector<4x255xf32>
    tpu.vector_store %arg7[%c40, %c0_62], %59 {strides = array<i32>} : memref<72x256xf32, #tpu.memory_space<vmem>>, vector<4x255xf32>,
    %c44 = arith.constant 44 : index
    %c0_63 = arith.constant 0 : index
    %63 = vector.load %arg7[%c44, %c0_63] : memref<72x256xf32, #tpu.memory_space<vmem>>, vector<4x255xf32>
    tpu.vector_store %arg7[%c44, %c0_63], %61 {strides = array<i32>} : memref<72x256xf32, #tpu.memory_space<vmem>>, vector<4x255xf32>,
    %cst_64 = arith.constant 0.000000e+00 : f32
    %64 = vector.broadcast %cst_64 : f32 to vector<8x1xf32>
    %c40_65 = arith.constant 40 : index
    %c255 = arith.constant 255 : index
    %65 = vector.load %arg7[%c40_65, %c255] : memref<72x256xf32, #tpu.memory_space<vmem>>, vector<8x1xf32>
    tpu.vector_store %arg7[%c40_65, %c255], %64 {strides = array<i32>} : memref<72x256xf32, #tpu.memory_space<vmem>>, vector<8x1xf32>,
    %c0_66 = arith.constant 0 : index
    %c0_67 = arith.constant 0 : index
    %c15_68 = arith.constant 15 : index
    %66 = vector.load %arg1[%c0_66, %c0_67, %c15_68] : memref<1x4x256xf32, #tpu.memory_space<vmem>>, vector<1x4x241xf32>
    %67 = vector.shape_cast %66 : vector<1x4x241xf32> to vector<4x241xf32>
    %c0_69 = arith.constant 0 : index
    %c0_70 = arith.constant 0 : index
    %c15_71 = arith.constant 15 : index
    %68 = vector.load %arg2[%c0_69, %c0_70, %c15_71] : memref<1x4x256xf32, #tpu.memory_space<vmem>>, vector<1x4x241xf32>
    %69 = vector.shape_cast %68 : vector<1x4x241xf32> to vector<4x241xf32>
    %c0_72 = arith.constant 0 : index
    %c0_73 = arith.constant 0 : index
    %70 = vector.load %arg5[%c0_72, %c0_73] : memref<2x256xf32, #tpu.memory_space<vmem>>, vector<1x241xf32>
    %71 = vector.broadcast %70 : vector<1x241xf32> to vector<4x241xf32>
    %72 = arith.mulf %67, %71 : vector<4x241xf32>
    %73 = vector.broadcast %70 : vector<1x241xf32> to vector<4x241xf32>
    %74 = arith.mulf %69, %73 : vector<4x241xf32>
    %c48 = arith.constant 48 : index
    %c0_74 = arith.constant 0 : index
    %75 = vector.load %arg7[%c48, %c0_74] : memref<72x256xf32, #tpu.memory_space<vmem>>, vector<4x241xf32>
    tpu.vector_store %arg7[%c48, %c0_74], %72 {strides = array<i32>} : memref<72x256xf32, #tpu.memory_space<vmem>>, vector<4x241xf32>,
    %c52 = arith.constant 52 : index
    %c0_75 = arith.constant 0 : index
    %76 = vector.load %arg7[%c52, %c0_75] : memref<72x256xf32, #tpu.memory_space<vmem>>, vector<4x241xf32>
    tpu.vector_store %arg7[%c52, %c0_75], %74 {strides = array<i32>} : memref<72x256xf32, #tpu.memory_space<vmem>>, vector<4x241xf32>,
    %cst_76 = arith.constant 0.000000e+00 : f32
    %77 = vector.broadcast %cst_76 : f32 to vector<8x15xf32>
    %c48_77 = arith.constant 48 : index
    %c241 = arith.constant 241 : index
    %78 = vector.load %arg7[%c48_77, %c241] : memref<72x256xf32, #tpu.memory_space<vmem>>, vector<8x15xf32>
    tpu.vector_store %arg7[%c48_77, %c241], %77 {strides = array<i32>} : memref<72x256xf32, #tpu.memory_space<vmem>>, vector<8x15xf32>,
    %c0_78 = arith.constant 0 : index
    %c0_79 = arith.constant 0 : index
    %c16_80 = arith.constant 16 : index
    %79 = vector.load %arg1[%c0_78, %c0_79, %c16_80] : memref<1x4x256xf32, #tpu.memory_space<vmem>>, vector<1x4x240xf32>
    %80 = vector.shape_cast %79 : vector<1x4x240xf32> to vector<4x240xf32>
    %c0_81 = arith.constant 0 : index
    %c0_82 = arith.constant 0 : index
    %c16_83 = arith.constant 16 : index
    %81 = vector.load %arg2[%c0_81, %c0_82, %c16_83] : memref<1x4x256xf32, #tpu.memory_space<vmem>>, vector<1x4x240xf32>
    %82 = vector.shape_cast %81 : vector<1x4x240xf32> to vector<4x240xf32>
    %c56 = arith.constant 56 : index
    %c0_84 = arith.constant 0 : index
    %83 = vector.load %arg7[%c56, %c0_84] : memref<72x256xf32, #tpu.memory_space<vmem>>, vector<4x240xf32>
    tpu.vector_store %arg7[%c56, %c0_84], %80 {strides = array<i32>} : memref<72x256xf32, #tpu.memory_space<vmem>>, vector<4x240xf32>,
    %c60 = arith.constant 60 : index
    %c0_85 = arith.constant 0 : index
    %84 = vector.load %arg7[%c60, %c0_85] : memref<72x256xf32, #tpu.memory_space<vmem>>, vector<4x240xf32>
    tpu.vector_store %arg7[%c60, %c0_85], %82 {strides = array<i32>} : memref<72x256xf32, #tpu.memory_space<vmem>>, vector<4x240xf32>,
    %cst_86 = arith.constant 0.000000e+00 : f32
    %85 = vector.broadcast %cst_86 : f32 to vector<8x16xf32>
    %c56_87 = arith.constant 56 : index
    %c240 = arith.constant 240 : index
    %86 = vector.load %arg7[%c56_87, %c240] : memref<72x256xf32, #tpu.memory_space<vmem>>, vector<8x16xf32>
    tpu.vector_store %arg7[%c56_87, %c240], %85 {strides = array<i32>} : memref<72x256xf32, #tpu.memory_space<vmem>>, vector<8x16xf32>,
    %c0_88 = arith.constant 0 : index
    %c0_89 = arith.constant 0 : index
    %c17_90 = arith.constant 17 : index
    %87 = vector.load %arg1[%c0_88, %c0_89, %c17_90] : memref<1x4x256xf32, #tpu.memory_space<vmem>>, vector<1x4x239xf32>
    %88 = vector.shape_cast %87 : vector<1x4x239xf32> to vector<4x239xf32>
    %c0_91 = arith.constant 0 : index
    %c0_92 = arith.constant 0 : index
    %c17_93 = arith.constant 17 : index
    %89 = vector.load %arg2[%c0_91, %c0_92, %c17_93] : memref<1x4x256xf32, #tpu.memory_space<vmem>>, vector<1x4x239xf32>
    %90 = vector.shape_cast %89 : vector<1x4x239xf32> to vector<4x239xf32>
    %c1_94 = arith.constant 1 : index
    %c0_95 = arith.constant 0 : index
    %91 = vector.load %arg5[%c1_94, %c0_95] : memref<2x256xf32, #tpu.memory_space<vmem>>, vector<1x239xf32>
    %92 = vector.broadcast %91 : vector<1x239xf32> to vector<4x239xf32>
    %93 = arith.mulf %88, %92 : vector<4x239xf32>
    %94 = vector.broadcast %91 : vector<1x239xf32> to vector<4x239xf32>
    %95 = arith.mulf %90, %94 : vector<4x239xf32>
    %c64 = arith.constant 64 : index
    %c0_96 = arith.constant 0 : index
    %96 = vector.load %arg7[%c64, %c0_96] : memref<72x256xf32, #tpu.memory_space<vmem>>, vector<4x239xf32>
    tpu.vector_store %arg7[%c64, %c0_96], %93 {strides = array<i32>} : memref<72x256xf32, #tpu.memory_space<vmem>>, vector<4x239xf32>,
    %c68 = arith.constant 68 : index
    %c0_97 = arith.constant 0 : index
    %97 = vector.load %arg7[%c68, %c0_97] : memref<72x256xf32, #tpu.memory_space<vmem>>, vector<4x239xf32>
    tpu.vector_store %arg7[%c68, %c0_97], %95 {strides = array<i32>} : memref<72x256xf32, #tpu.memory_space<vmem>>, vector<4x239xf32>,
    %cst_98 = arith.constant 0.000000e+00 : f32
    %98 = vector.broadcast %cst_98 : f32 to vector<8x17xf32>
    %c64_99 = arith.constant 64 : index
    %c239 = arith.constant 239 : index
    %99 = vector.load %arg7[%c64_99, %c239] : memref<72x256xf32, #tpu.memory_space<vmem>>, vector<8x17xf32>
    tpu.vector_store %arg7[%c64_99, %c239], %98 {strides = array<i32>} : memref<72x256xf32, #tpu.memory_space<vmem>>, vector<8x17xf32>,
    %c0_100 = arith.constant 0 : index
    %c0_101 = arith.constant 0 : index
    %100 = vector.load %arg3[%c0_100, %c0_101] : memref<4x72xf32, #tpu.memory_space<vmem>>, vector<4x72xf32>
    %c0_102 = arith.constant 0 : index
    %c0_103 = arith.constant 0 : index
    %101 = vector.load %arg7[%c0_102, %c0_103] : memref<72x256xf32, #tpu.memory_space<vmem>>, vector<72x256xf32>
    %cst_104 = arith.constant dense<0.000000e+00> : vector<4x256xf32>
    %102 = tpu.matmul %100, %101, %cst_104 {dimension_numbers = #tpu.dot_dimension_numbers<[1], [0], [0], [1], [0, 0, 1, 1], [], []>} : vector<4x72xf32>, vector<72x256xf32>, vector<4x256xf32> -> vector<4x256xf32>
    %c0_105 = arith.constant 0 : index
    %c0_106 = arith.constant 0 : index
    %103 = vector.load %arg4[%c0_105, %c0_106] : memref<4x1xf32, #tpu.memory_space<vmem>>, vector<4x1xf32>
    %104 = vector.broadcast %103 : vector<4x1xf32> to vector<4x256xf32>
    %105 = arith.addf %102, %104 : vector<4x256xf32>
    %c0_107 = arith.constant 0 : index
    %c0_108 = arith.constant 0 : index
    %c0_109 = arith.constant 0 : index
    %106 = vector.load %arg6[%c0_107, %c0_108, %c0_109] : memref<1x4x256xf32, #tpu.memory_space<vmem>>, vector<1x4x256xf32>
    %107 = vector.shape_cast %106 : vector<1x4x256xf32> to vector<4x256xf32>
    %108 = vector.shape_cast %105 : vector<4x256xf32> to vector<1x4x256xf32>
    tpu.vector_store %arg6[%c0_107, %c0_108, %c0_109], %108 {strides = array<i32>} : memref<1x4x256xf32, #tpu.memory_space<vmem>>, vector<1x4x256xf32>,
    return
  }
  func.func @transform_0(%arg0: i32) -> (i32, i32, i32) {
    %c0_i32 = arith.constant 0 : i32
    %c0_i32_0 = arith.constant 0 : i32
    %c0_i32_1 = arith.constant 0 : i32
    return %arg0, %c0_i32, %c0_i32_0 : i32, i32, i32
  }
  func.func @transform_1(%arg0: i32) -> (i32, i32, i32) {
    %c0_i32 = arith.constant 0 : i32
    %c0_i32_0 = arith.constant 0 : i32
    %c0_i32_1 = arith.constant 0 : i32
    return %arg0, %c0_i32, %c0_i32_0 : i32, i32, i32
  }
  func.func @transform_2(%arg0: i32) -> (i32, i32) {
    %c0_i32 = arith.constant 0 : i32
    %c0_i32_0 = arith.constant 0 : i32
    %c0_i32_1 = arith.constant 0 : i32
    return %c0_i32, %c0_i32_0 : i32, i32
  }
  func.func @transform_3(%arg0: i32) -> (i32, i32) {
    %c0_i32 = arith.constant 0 : i32
    %c0_i32_0 = arith.constant 0 : i32
    %c0_i32_1 = arith.constant 0 : i32
    return %c0_i32, %c0_i32_0 : i32, i32
  }
  func.func @transform_4(%arg0: i32) -> (i32, i32) {
    %c0_i32 = arith.constant 0 : i32
    %c0_i32_0 = arith.constant 0 : i32
    %c0_i32_1 = arith.constant 0 : i32
    return %c0_i32, %c0_i32_0 : i32, i32
  }
  func.func @transform_5(%arg0: i32) -> (i32, i32, i32) {
    %c0_i32 = arith.constant 0 : i32
    %c0_i32_0 = arith.constant 0 : i32
    %c0_i32_1 = arith.constant 0 : i32
    return %arg0, %c0_i32, %c0_i32_0 : i32, i32, i32
  }
}

</mosaic_0001>

<llo_original>
// kernel: fam_forward.1
$region0: #{fam_forward.1}
  #allocation0 [shape = 'u32[]', space=smem, size = 0x4, offset = 0x4, fixed_abs, tag = 'smem constant byte address 0x4 - core index']
  #allocation1 [shape = 'u32[144,128]{1,0:T(1,128)}', space=vmem, size = 0x12000, scoped, tag = 'internal scratch']
  #allocation2 [shape = 'f32[72,256]{1,0:T(8,128)}', space=vmem, size = 0x12000, scoped, tag = 'scratch operand']
  %s0 = inlined_call_operand.vmem [shape: f32[2,4,256], index: 0, kind: input, shape index: {}]
  %s1 = inlined_call_operand.vmem [shape: f32[2,4,256], index: 1, kind: input, shape index: {}]
  %s2 = inlined_call_operand.vmem [shape: f32[4,72], index: 2, kind: input, shape index: {}]
  %s3 = inlined_call_operand.vmem [shape: f32[4,1], index: 3, kind: input, shape index: {}]
  %s4 = inlined_call_operand.vmem [shape: f32[2,256], index: 4, kind: input, shape index: {}]
  %s5 = inlined_call_operand.vmem [shape: f32[2,4,256], index: 5, kind: output, shape index: {}]
  %s6 = sld [smem:[#allocation0]]
  $region53: #{fam_forward.1} parent=0
    _
  %s8 = ssub.s32 1, %s6
  %s9 = scalar_select 0, %s8, %s6
  loop: start=0, step=1, limit=4
  $region2: #{fam_forward.1} parent=0 // loop_pre_header
    _
  $region3: #{fam_forward.1} parent=0 // loop_header
    %s11 = sphi 0, %s15
    %p12 = scmp.ge.s32.totalorder %s11, 4
    %s21 = sphi 0, %s23
    %s24 = sphi 0, %s21
    %s25 = sphi 0, %s24
    %s41 = sphi 0, %s25
    %s47 = sphi 0, %s49
    %s50 = sphi 0, %s47
    %s51 = sphi 0, %s50
    %s67 = sphi 0, %s51
    %s71 = sphi 0, %s71
    %s73 = sphi 0, %s71
    %s74 = sphi 0, %s73
    %s88 = sphi 0, %s74
    %s92 = sphi 0, %s92
    %s94 = sphi 0, %s92
    %s95 = sphi 0, %s94
    %s109 = sphi 0, %s95
    %s113 = sphi 0, %s113
    %s115 = sphi 0, %s113
    %s116 = sphi 0, %s115
    %s130 = sphi 0, %s116
    %s136 = sphi 0, %s138
    %s139 = sphi 0, %s136
    %s140 = sphi 0, %s139
    %s156 = sphi 0, %s140
  $region4: #{fam_forward.1} parent=0 // loop_header_branch
    %14 = sbr.rel (%p12) target = $region8
  $region5: #{fam_forward.1} parent=0 // loop_body
    %s16 = ssub.s32 %s11, 1
    %s17 = ssub.s32 %s11, 2
    %s18 = sadd.s32 %s11, 1
    %s19 = ssub.s32 %s11, %s18
    %p20 = scmp.eq.s32.totalorder %s19, 0
    %s22 = sadd.s32 %s21, 1
    %s23 = scalar_select %p20, %s21, %s22
    %p26 = pneg %p20
    %p27 = scmp.eq.s32.totalorder %s11, 1
    %p28 = por %p26, %p27
    %p29 = scmp.ne.s32.totalorder %s21, %s24
    %p30 = scmp.eq.s32.totalorder %s11, 0
    %p31 = por %p29, %p30
    %p32 = scmp.ne.s32.totalorder %s21, %s24
    %p33 = scmp.eq.s32.totalorder %s16, 1
    %p34 = por %p32, %p33
    %p35 = scmp.ne.s32.totalorder %s24, %s25
    %p36 = scmp.eq.s32.totalorder %s16, 0
    %p37 = por %p35, %p36
    %p38 = scmp.ne.s32.totalorder %s24, %s25
    %p39 = scmp.eq.s32.totalorder %s17, 1
    %p40 = por %p38, %p39
    %p42 = scmp.ne.s32.totalorder %s25, %s41
    %p43 = scmp.eq.s32.totalorder %s17, 0
    %p44 = por %p42, %p43
    %s45 = ssub.s32 %s11, %s18
    %p46 = scmp.eq.s32.totalorder %s45, 0
    %s48 = sadd.s32 %s47, 1
    %s49 = scalar_select %p46, %s47, %s48
    %p52 = pneg %p46
    %p53 = scmp.eq.s32.totalorder %s11, 1
    %p54 = por %p52, %p53
    %p55 = scmp.ne.s32.totalorder %s47, %s50
    %p56 = scmp.eq.s32.totalorder %s11, 0
    %p57 = por %p55, %p56
    %p58 = scmp.ne.s32.totalorder %s47, %s50
    %p59 = scmp.eq.s32.totalorder %s16, 1
    %p60 = por %p58, %p59
    %p61 = scmp.ne.s32.totalorder %s50, %s51
    %p62 = scmp.eq.s32.totalorder %s16, 0
    %p63 = por %p61, %p62
    %p64 = scmp.ne.s32.totalorder %s50, %s51
    %p65 = scmp.eq.s32.totalorder %s17, 1
    %p66 = por %p64, %p65
    %p68 = scmp.ne.s32.totalorder %s51, %s67
    %p69 = scmp.eq.s32.totalorder %s17, 0
    %p70 = por %p68, %p69
    %s72 = sadd.s32 %s71, 1
    %p75 = scmp.eq.s32.totalorder %s11, 1
    %p76 = scmp.ne.s32.totalorder %s71, %s73
    %p77 = scmp.eq.s32.totalorder %s11, 0
    %p78 = por %p76, %p77
    %p79 = scmp.ne.s32.totalorder %s71, %s73
    %p80 = scmp.eq.s32.totalorder %s16, 1
    %p81 = por %p79, %p80
    %p82 = scmp.ne.s32.totalorder %s73, %s74
    %p83 = scmp.eq.s32.totalorder %s16, 0
    %p84 = por %p82, %p83
    %p85 = scmp.ne.s32.totalorder %s73, %s74
    %p86 = scmp.eq.s32.totalorder %s17, 1
    %p87 = por %p85, %p86
    %p89 = scmp.ne.s32.totalorder %s74, %s88
    %p90 = scmp.eq.s32.totalorder %s17, 0
    %p91 = por %p89, %p90
    %s93 = sadd.s32 %s92, 1
    %p96 = scmp.eq.s32.totalorder %s11, 1
    %p97 = scmp.ne.s32.totalorder %s92, %s94
    %p98 = scmp.eq.s32.totalorder %s11, 0
    %p99 = por %p97, %p98
    %p100 = scmp.ne.s32.totalorder %s92, %s94
    %p101 = scmp.eq.s32.totalorder %s16, 1
    %p102 = por %p100, %p101
    %p103 = scmp.ne.s32.totalorder %s94, %s95
    %p104 = scmp.eq.s32.totalorder %s16, 0
    %p105 = por %p103, %p104
    %p106 = scmp.ne.s32.totalorder %s94, %s95
    %p107 = scmp.eq.s32.totalorder %s17, 1
    %p108 = por %p106, %p107
    %p110 = scmp.ne.s32.totalorder %s95, %s109
    %p111 = scmp.eq.s32.totalorder %s17, 0
    %p112 = por %p110, %p111
    %s114 = sadd.s32 %s113, 1
    %p117 = scmp.eq.s32.totalorder %s11, 1
    %p118 = scmp.ne.s32.totalorder %s113, %s115
    %p119 = scmp.eq.s32.totalorder %s11, 0
    %p120 = por %p118, %p119
    %p121 = scmp.ne.s32.totalorder %s113, %s115
    %p122 = scmp.eq.s32.totalorder %s16, 1
    %p123 = por %p121, %p122
    %p124 = scmp.ne.s32.totalorder %s115, %s116
    %p125 = scmp.eq.s32.totalorder %s16, 0
    %p126 = por %p124, %p125
    %p127 = scmp.ne.s32.totalorder %s115, %s116
    %p128 = scmp.eq.s32.totalorder %s17, 1
    %p129 = por %p127, %p128
    %p131 = scmp.ne.s32.totalorder %s116, %s130
    %p132 = scmp.eq.s32.totalorder %s17, 0
    %p133 = por %p131, %p132
    %s134 = ssub.s32 %s11, %s18
    %p135 = scmp.eq.s32.totalorder %s134, 0
    %s137 = sadd.s32 %s136, 1
    %s138 = scalar_select %p135, %s136, %s137
    %p141 = pneg %p135
    %p142 = scmp.eq.s32.totalorder %s11, 1
    %p143 = por %p141, %p142
    %p144 = scmp.ne.s32.totalorder %s136, %s139
    %p145 = scmp.eq.s32.totalorder %s11, 0
    %p146 = por %p144, %p145
    %p147 = scmp.ne.s32.totalorder %s136, %s139
    %p148 = scmp.eq.s32.totalorder %s16, 1
    %p149 = por %p147, %p148
    %p150 = scmp.ne.s32.totalorder %s139, %s140
    %p151 = scmp.eq.s32.totalorder %s16, 0
    %p152 = por %p150, %p151
    %p153 = scmp.ne.s32.totalorder %s139, %s140
    %p154 = scmp.eq.s32.totalorder %s17, 1
    %p155 = por %p153, %p154
    %p157 = scmp.ne.s32.totalorder %s140, %s156
    %p158 = scmp.eq.s32.totalorder %s17, 0
    %p159 = por %p157, %p158
    %p160 = scmp.le.s32.totalorder 1, %s11
    %p161 = scmp.lt.s32.totalorder %s11, 3
    %p162 = pnand %p160, %p161
    %p163 = pneg %p162
    // Predicated region
    $region9: #{fam_forward.1} parent=5 // pred_check
      _
    $region10: #{fam_forward.1} parent=5 // pred_check_branch
      %165 = sbr.rel (%p162) target = $region12
    $region11: #{fam_forward.1} parent=5 // pred_region
      %s166 = ssub.s32 %s11, 1
      // Predicated region
      $region13: #{fam_forward.1} parent=11 // pred_check
        %p167 = pneg %p84
      $region14: #{fam_forward.1} parent=11 // pred_check_branch
        %169 = sbr.rel (%p167) target = $region16
      $region15: #{fam_forward.1} parent=11 // pred_region
        _
      $region16: #{fam_forward.1} parent=11 // pred_fallthru
        _
      // Predicated region
      $region17: #{fam_forward.1} parent=11 // pred_check
        %p170 = pneg %p105
      $region18: #{fam_forward.1} parent=11 // pred_check_branch
        %172 = sbr.rel (%p170) target = $region20
      $region19: #{fam_forward.1} parent=11 // pred_region
        _
      $region20: #{fam_forward.1} parent=11 // pred_fallthru
        _
      // Predicated region
      $region21: #{fam_forward.1} parent=11 // pred_check
        %p173 = pneg %p126
      $region22: #{fam_forward.1} parent=11 // pred_check_branch
        %175 = sbr.rel (%p173) target = $region24
      $region23: #{fam_forward.1} parent=11 // pred_region
        _
      $region24: #{fam_forward.1} parent=11 // pred_fallthru
        _
    $region12: #{fam_forward.1} parent=5 // pred_fallthru
      _
    %p176 = scmp.lt.s32.totalorder %s11, 2
    // Predicated region
    $region25: #{fam_forward.1} parent=5 // pred_check
      %p177 = pneg %p176
    $region26: #{fam_forward.1} parent=5 // pred_check_branch
      %179 = sbr.rel (%p177) target = $region28
    $region27: #{fam_forward.1} parent=5 // pred_region
      // Predicated region
      $region29: #{fam_forward.1} parent=27 // pred_check
        %p180 = pneg %p31
      $region30: #{fam_forward.1} parent=27 // pred_check_branch
        %182 = sbr.rel (%p180) target = $region32
      $region31: #{fam_forward.1} parent=27 // pred_region
        %p183 = scmp.lt.s32.totalorder %s11, 1
        %s184 = scalar_select %p183, %s11, 1
        %s185 = smul.addr %s184, 2
        %s186 = smul.addr %s185, 4
        %s187 = scalar_lea.vmem %s0, %s186
      $region32: #{fam_forward.1} parent=27 // pred_fallthru
        _
      // Predicated region
      $region33: #{fam_forward.1} parent=27 // pred_check
        %p188 = pneg %p57
      $region34: #{fam_forward.1} parent=27 // pred_check_branch
        %190 = sbr.rel (%p188) target = $region36
      $region35: #{fam_forward.1} parent=27 // pred_region
        %p191 = scmp.lt.s32.totalorder %s11, 1
        %s192 = scalar_select %p191, %s11, 1
        %s193 = smul.addr %s192, 2
        %s194 = smul.addr %s193, 4
        %s195 = scalar_lea.vmem %s1, %s194
      $region36: #{fam_forward.1} parent=27 // pred_fallthru
        _
    $region28: #{fam_forward.1} parent=5 // pred_fallthru
      _
    %p196 = scmp.le.s32.totalorder 1, %s11
    %p197 = scmp.lt.s32.totalorder %s11, 3
    %p198 = pnand %p196, %p197
    %p199 = pneg %p198
    // Predicated region
    $region37: #{fam_forward.1} parent=5 // pred_check
      _
    $region38: #{fam_forward.1} parent=5 // pred_check_branch
      %201 = sbr.rel (%p198) target = $region40
    $region39: #{fam_forward.1} parent=5 // pred_region
      %s202 = ssub.s32 %s11, 1
      %p203 = scmp.lt.s32.totalorder %s16, 1
      %s204 = scalar_select %p203, %s16, 1
      %s205 = smul.addr %s204, 2
      %s206 = smul.addr %s205, 4
      %s207 = scalar_lea.vmem %s0, %s206
      %p208 = pneg %p37
      %p209 = pneg %p34
      %p210 = scmp.lt.s32.totalorder %s16, 1
      %s211 = scalar_select %p210, %s16, 1
      %s212 = smul.addr %s211, 2
      %s213 = smul.addr %s212, 4
      %s214 = scalar_lea.vmem %s1, %s213
      %p215 = pneg %p63
      %p216 = pneg %p60
      %p217 = pneg %p84
      %p218 = pneg %p81
      %p219 = pneg %p105
      %p220 = pneg %p102
      %p221 = pneg %p126
      %p222 = pneg %p123
      %p223 = pneg %p152
      %p224 = pneg %p149
      %p225 = scmp.lt.s32.totalorder %s16, 1
      %s226 = scalar_select %p225, %s16, 1
      %s227 = smul.addr %s226, 2
      %s228 = smul.addr %s227, 4
      %s229 = scalar_lea.vmem %s5, %s228
      %p230 = scmp.lt.s32.totalorder %s16, 1
      %s231 = scalar_select %p230, %s16, 1
      %s232 = smul.addr %s231, 2
      %s233 = smul.addr %s232, 4
      %s234 = scalar_lea.vmem %s0, %s233
      %p235 = scmp.lt.s32.totalorder %s16, 1
      %s236 = scalar_select %p235, %s16, 1
      %s237 = smul.addr %s236, 2
      %s238 = smul.addr %s237, 4
      %s239 = scalar_lea.vmem %s1, %s238
      %p240 = scmp.lt.s32.totalorder %s16, 1
      %s241 = scalar_select %p240, %s16, 1
      %s242 = smul.addr %s241, 2
      %s243 = smul.addr %s242, 4
      %s244 = scalar_lea.vmem %s5, %s243
      %v245 = vld [vmem:[%s234] sm:$0xff]
      %v246 = vld [vmem:[%s239] sm:$0xff]
      %v247 = vld [vmem:[%s4] ss:$2 sm:$0x3]
      %v249 = vlaneseq
      %v250 = vshrl.u32 %v249, 7
      %v251 = vsub.s32 0, %v250
      %v252 = vrot.slane %v247, %v251
      %v253 = vlaneseq
      %v254 = vshrl.u32 %v253, 7
      %v255 = vsub.s32 1, %v254
      %v256 = vrot.slane %v247, %v255
      %v257 = vcombine.low %v252, %v256
      %258 = vrot.lane.b32.xlu0 %v257, 111
      %v259 = vpop.permute.xlu0 %258
      %v260 = vrot.slane %v259, 4
      %vm261 = vcmask 908288
      %v262 = vsel %vm261, %v259, %v260
      %v264 = vmul.f32 %v245, %v262
      %v265 = vmul.f32 %v246, %v262
      %v267 = vcombine.high %v264, %v264
      %268 = vrot.lane.b32.xlu0 %v264, 17
      %v269 = vpop.permute.xlu0 %268
      %270 = vrot.lane.b32.xlu0 %v267, 17
      %v271 = vpop.permute.xlu0 %270
      %vm272 = vcmask 138240
      %v273 = vsel %vm272, %v269, %v271
      %vm276 = vcmask 1043592
      %277 = vst.msk [vmem:[#allocation2] sm:$0xf] %vm276, %v269
      %278 = vst [vmem:[#allocation2 + $0x8] sm:$0xf] %v273
      %v280 = vcombine.low %v265, %v265
      %281 = vrot.lane.b32.xlu0 %v280, 17
      %v282 = vpop.permute.xlu0 %281
      %283 = vrot.lane.b32.xlu0 %v265, 17
      %v284 = vpop.permute.xlu0 %283
      %v285 = vsel %vm272, %v282, %v284
      %vm288 = vcmask 1047692
      %289 = vst.msk [vmem:[#allocation2] sm:$0xf0] %vm288, %v282
      %290 = vst [vmem:[#allocation2 + $0x8] sm:$0xf0] %v285
      %291 = vst.msk [vmem:[#allocation2] sm:$0xff] %vm272, 0.0
      %v292 = vld [vmem:[%s234] sm:$0xff]
      %v293 = vld [vmem:[%s239] sm:$0xff]
      %v295 = vcombine.high %v292, %v292
      %296 = vrot.lane.b32.xlu0 %v292, 16
      %v297 = vpop.permute.xlu0 %296
      %298 = vrot.lane.b32.xlu0 %v295, 16
      %v299 = vpop.permute.xlu0 %298
      %vm300 = vcmask 130048
      %v301 = vsel %vm300, %v297, %v299
      %vm304 = vcmask 1043584
      %305 = vst.msk [vmem:[#allocation2 + $0x10] sm:$0xf] %vm304, %v297
      %306 = vst [vmem:[#allocation2 + $0x18] sm:$0xf] %v301
      %v308 = vcombine.low %v293, %v293
      %309 = vrot.lane.b32.xlu0 %v308, 16
      %v310 = vpop.permute.xlu0 %309
      %311 = vrot.lane.b32.xlu0 %v293, 16
      %v312 = vpop.permute.xlu0 %311
      %v313 = vsel %vm300, %v310, %v312
      %vm316 = vcmask 1047684
      %317 = vst.msk [vmem:[#allocation2 + $0x10] sm:$0xf0] %vm316, %v310
      %318 = vst [vmem:[#allocation2 + $0x18] sm:$0xf0] %v313
      %319 = vst.msk [vmem:[#allocation2 + $0x10] sm:$0xff] %vm300, 0.0
      %v320 = vld [vmem:[%s234] sm:$0xff]
      %v321 = vld [vmem:[%s239] sm:$0xff]
      %s322 = scalar_lea.vmem %s4, 1
      %v323 = vld [vmem:[%s322] ss:$2 sm:$0x3]
      %v325 = vlaneseq
      %v326 = vshrl.u32 %v325, 7
      %v327 = vsub.s32 0, %v326
      %v328 = vrot.slane %v323, %v327
      %v329 = vlaneseq
      %v330 = vshrl.u32 %v329, 7
      %v331 = vsub.s32 1, %v330
      %v332 = vrot.slane %v323, %v331
      %v333 = vcombine.low %v328, %v332
      %334 = vrot.lane.b32.xlu0 %v333, 113
      %v335 = vpop.permute.xlu0 %334
      %v336 = vrot.slane %v335, 4
      %vm337 = vcmask 924672
      %v338 = vsel %vm337, %v335, %v336
      %v340 = vmul.f32 %v320, %v338
      %v341 = vmul.f32 %v321, %v338
      %v343 = vcombine.high %v340, %v340
      %344 = vrot.lane.b32.xlu0 %v340, 15
      %v345 = vpop.permute.xlu0 %344
      %346 = vrot.lane.b32.xlu0 %v343, 15
      %v347 = vpop.permute.xlu0 %346
      %vm348 = vcmask 121856
      %v349 = vsel %vm348, %v345, %v347
      %vm352 = vcmask 1043576
      %353 = vst.msk [vmem:[#allocation2 + $0x20] sm:$0xf] %vm352, %v345
      %354 = vst [vmem:[#allocation2 + $0x28] sm:$0xf] %v349
      %v356 = vcombine.low %v341, %v341
      %357 = vrot.lane.b32.xlu0 %v356, 15
      %v358 = vpop.permute.xlu0 %357
      %359 = vrot.lane.b32.xlu0 %v341, 15
      %v360 = vpop.permute.xlu0 %359
      %v361 = vsel %vm348, %v358, %v360
      %vm364 = vcmask 1047676
      %365 = vst.msk [vmem:[#allocation2 + $0x20] sm:$0xf0] %vm364, %v358
      %366 = vst [vmem:[#allocation2 + $0x28] sm:$0xf0] %v361
      %367 = vst.msk [vmem:[#allocation2 + $0x20] sm:$0xff] %vm348, 0.0
      %v368 = vld [vmem:[%s234] sm:$0xff]
      %v369 = vld [vmem:[%s239] sm:$0xff]
      %v370 = vld [vmem:[%s4] ss:$2 sm:$0x3]
      %v372 = vlaneseq
      %v373 = vshrl.u32 %v372, 7
      %v374 = vsub.s32 0, %v373
      %v375 = vrot.slane %v370, %v374
      %v376 = vlaneseq
      %v377 = vshrl.u32 %v376, 7
      %v378 = vsub.s32 1, %v377
      %v379 = vrot.slane %v370, %v378
      %v380 = vcombine.low %v375, %v379
      %381 = vrot.lane.b32.xlu0 %v380, 127
      %v382 = vpop.permute.xlu0 %381
      %v383 = vrot.slane %v382, 4
      %vm384 = vcmask 1039360
      %v385 = vsel %vm384, %v382, %v383
      %v387 = vmul.f32 %v368, %v385
      %v388 = vmul.f32 %v369, %v385
      %v390 = vcombine.high %v387, %v387
      %391 = vrot.lane.b32.xlu0 %v387, 1
      %v392 = vpop.permute.xlu0 %391
      %393 = vrot.lane.b32.xlu0 %v390, 1
      %v394 = vpop.permute.xlu0 %393
      %vm395 = vcmask 7168
      %v396 = vsel %vm395, %v392, %v394
      %vm399 = vcmask 1043464
      %400 = vst.msk [vmem:[#allocation2 + $0x30] sm:$0xf] %vm399, %v392
      %401 = vst [vmem:[#allocation2 + $0x38] sm:$0xf] %v396
      %v403 = vcombine.low %v388, %v388
      %404 = vrot.lane.b32.xlu0 %v403, 1
      %v405 = vpop.permute.xlu0 %404
      %406 = vrot.lane.b32.xlu0 %v388, 1
      %v407 = vpop.permute.xlu0 %406
      %v408 = vsel %vm395, %v405, %v407
      %vm411 = vcmask 1047564
      %412 = vst.msk [vmem:[#allocation2 + $0x30] sm:$0xf0] %vm411, %v405
      %413 = vst [vmem:[#allocation2 + $0x38] sm:$0xf0] %v408
      %414 = vst.msk [vmem:[#allocation2 + $0x30] sm:$0xff] %vm395, 0.0
      %v415 = vld [vmem:[%s234] sm:$0xff]
      %v416 = vld [vmem:[%s239] sm:$0xff]
      %v418 = vcombine.high %v415, %v415
      %420 = vst [vmem:[#allocation2 + $0x40] sm:$0xf] %v415
      %421 = vst [vmem:[#allocation2 + $0x48] sm:$0xf] %v418
      %v423 = vcombine.low %v416, %v416
      %425 = vst [vmem:[#allocation2 + $0x40] sm:$0xf0] %v423
      %426 = vst [vmem:[#allocation2 + $0x48] sm:$0xf0] %v416
      %v427 = vld [vmem:[%s234] sm:$0xff]
      %v428 = vld [vmem:[%s239] sm:$0xff]
      %v429 = vld [vmem:[%s322] ss:$2 sm:$0x3]
      %v431 = vlaneseq
      %v432 = vshrl.u32 %v431, 7
      %v433 = vsub.s32 0, %v432
      %v434 = vrot.slane %v429, %v433
      %v435 = vlaneseq
      %v436 = vshrl.u32 %v435, 7
      %v437 = vsub.s32 1, %v436
      %v438 = vrot.slane %v429, %v437
      %v439 = vcombine.low %v434, %v438
      %440 = vrot.lane.b32.xlu0 %v439, 1
      %v441 = vpop.permute.xlu0 %440
      %v442 = vrot.slane %v441, 4
      %v443 = vsel %vm395, %v442, %v441
      %v445 = vmul.f32 %v427, %v443
      %v446 = vmul.f32 %v428, %v443
      %v448 = vcombine.high %v445, %v445
      %449 = vrot.lane.b32.xlu0 %v445, 127
      %v450 = vpop.permute.xlu0 %449
      %451 = vrot.lane.b32.xlu0 %v448, 127
      %v452 = vpop.permute.xlu0 %451
      %v453 = vsel %vm384, %v450, %v452
      %456 = vst [vmem:[#allocation2 + $0x50] sm:$0xf] %v453
      %vm457 = vcmask 1035264
      %458 = vst.msk [vmem:[#allocation2 + $0x58] sm:$0xf] %vm457, %v452
      %v460 = vcombine.low %v446, %v446
      %461 = vrot.lane.b32.xlu0 %v460, 127
      %v462 = vpop.permute.xlu0 %461
      %463 = vrot.lane.b32.xlu0 %v446, 127
      %v464 = vpop.permute.xlu0 %463
      %v465 = vsel %vm384, %v462, %v464
      %468 = vst [vmem:[#allocation2 + $0x50] sm:$0xf0] %v465
      %vm469 = vcmask 1039364
      %470 = vst.msk [vmem:[#allocation2 + $0x58] sm:$0xf0] %vm469, %v464
      %vm471 = vcmask 1048568
      %472 = vst.msk [vmem:[#allocation2 + $0x58] sm:$0xff] %vm471, 0.0
      %v473 = vld [vmem:[%s234] sm:$0xff]
      %v474 = vld [vmem:[%s239] sm:$0xff]
      %v475 = vld [vmem:[%s4] ss:$2 sm:$0x3]
      %v477 = vlaneseq
      %v478 = vshrl.u32 %v477, 7
      %v479 = vsub.s32 0, %v478
      %v480 = vrot.slane %v475, %v479
      %v481 = vlaneseq
      %v482 = vshrl.u32 %v481, 7
      %v483 = vsub.s32 1, %v482
      %v484 = vrot.slane %v475, %v483
      %v485 = vcombine.low %v480, %v484
      %486 = vrot.lane.b32.xlu0 %v485, 15
      %v487 = vpop.permute.xlu0 %486
      %v488 = vrot.slane %v487, 4
      %v489 = vsel %vm348, %v488, %v487
      %v491 = vmul.f32 %v473, %v489
      %v492 = vmul.f32 %v474, %v489
      %v494 = vcombine.high %v491, %v491
      %495 = vrot.lane.b32.xlu0 %v491, 113
      %v496 = vpop.permute.xlu0 %495
      %497 = vrot.lane.b32.xlu0 %v494, 113
      %v498 = vpop.permute.xlu0 %497
      %v499 = vsel %vm337, %v496, %v498
      %502 = vst [vmem:[#allocation2 + $0x60] sm:$0xf] %v499
      %vm503 = vcmask 920576
      %504 = vst.msk [vmem:[#allocation2 + $0x68] sm:$0xf] %vm503, %v498
      %v506 = vcombine.low %v492, %v492
      %507 = vrot.lane.b32.xlu0 %v506, 113
      %v508 = vpop.permute.xlu0 %507
      %509 = vrot.lane.b32.xlu0 %v492, 113
      %v510 = vpop.permute.xlu0 %509
      %v511 = vsel %vm337, %v508, %v510
      %514 = vst [vmem:[#allocation2 + $0x60] sm:$0xf0] %v511
      %vm515 = vcmask 924676
      %516 = vst.msk [vmem:[#allocation2 + $0x68] sm:$0xf0] %vm515, %v510
      %vm517 = vcmask 1048456
      %518 = vst.msk [vmem:[#allocation2 + $0x68] sm:$0xff] %vm517, 0.0
      %v519 = vld [vmem:[%s234] sm:$0xff]
      %v520 = vld [vmem:[%s239] sm:$0xff]
      %v522 = vcombine.high %v519, %v519
      %523 = vrot.lane.b32.xlu0 %v519, 112
      %v524 = vpop.permute.xlu0 %523
      %525 = vrot.lane.b32.xlu0 %v522, 112
      %v526 = vpop.permute.xlu0 %525
      %vm527 = vcmask 916480
      %v528 = vsel %vm527, %v524, %v526
      %531 = vst [vmem:[#allocation2 + $0x70] sm:$0xf] %v528
      %vm532 = vcmask 912384
      %533 = vst.msk [vmem:[#allocation2 + $0x78] sm:$0xf] %vm532, %v526
      %v535 = vcombine.low %v520, %v520
      %536 = vrot.lane.b32.xlu0 %v535, 112
      %v537 = vpop.permute.xlu0 %536
      %538 = vrot.lane.b32.xlu0 %v520, 112
      %v539 = vpop.permute.xlu0 %538
      %v540 = vsel %vm527, %v537, %v539
      %543 = vst [vmem:[#allocation2 + $0x70] sm:$0xf0] %v540
      %vm544 = vcmask 916484
      %545 = vst.msk [vmem:[#allocation2 + $0x78] sm:$0xf0] %vm544, %v539
      %vm546 = vcmask 1048448
      %547 = vst.msk [vmem:[#allocation2 + $0x78] sm:$0xff] %vm546, 0.0
      %v548 = vld [vmem:[%s234] sm:$0xff]
      %v549 = vld [vmem:[%s239] sm:$0xff]
      %v550 = vld [vmem:[%s322] ss:$2 sm:$0x3]
      %v552 = vlaneseq
      %v553 = vshrl.u32 %v552, 7
      %v554 = vsub.s32 0, %v553
      %v555 = vrot.slane %v550, %v554
      %v556 = vlaneseq
      %v557 = vshrl.u32 %v556, 7
      %v558 = vsub.s32 1, %v557
      %v559 = vrot.slane %v550, %v558
      %v560 = vcombine.low %v555, %v559
      %561 = vrot.lane.b32.xlu0 %v560, 17
      %v562 = vpop.permute.xlu0 %561
      %v563 = vrot.slane %v562, 4
      %v564 = vsel %vm272, %v563, %v562
      %v566 = vmul.f32 %v548, %v564
      %v567 = vmul.f32 %v549, %v564
      %v569 = vcombine.high %v566, %v566
      %570 = vrot.lane.b32.xlu0 %v566, 111
      %v571 = vpop.permute.xlu0 %570
      %572 = vrot.lane.b32.xlu0 %v569, 111
      %v573 = vpop.permute.xlu0 %572
      %v574 = vsel %vm261, %v571, %v573
      %577 = vst [vmem:[#allocation2 + $0x80] sm:$0xf] %v574
      %vm578 = vcmask 904192
      %579 = vst.msk [vmem:[#allocation2 + $0x88] sm:$0xf] %vm578, %v573
      %v581 = vcombine.low %v567, %v567
      %582 = vrot.lane.b32.xlu0 %v581, 111
      %v583 = vpop.permute.xlu0 %582
      %584 = vrot.lane.b32.xlu0 %v567, 111
      %v585 = vpop.permute.xlu0 %584
      %v586 = vsel %vm261, %v583, %v585
      %589 = vst [vmem:[#allocation2 + $0x80] sm:$0xf0] %v586
      %vm590 = vcmask 908292
      %591 = vst.msk [vmem:[#allocation2 + $0x88] sm:$0xf0] %vm590, %v585
      %vm592 = vcmask 1048440
      %593 = vst.msk [vmem:[#allocation2 + $0x88] sm:$0xff] %vm592, 0.0
      %v594 = vld [vmem:[%s2] sm:$0xf]
      %v595 = vld [vmem:[#allocation2] sm:$0xff]
      %v596 = vld [vmem:[#allocation2 + $0x8] sm:$0xff]
      %v597 = vld [vmem:[#allocation2 + $0x10] sm:$0xff]
      %v598 = vld [vmem:[#allocation2 + $0x18] sm:$0xff]
      %v599 = vld [vmem:[#allocation2 + $0x20] sm:$0xff]
      %v600 = vld [vmem:[#allocation2 + $0x28] sm:$0xff]
      %v601 = vld [vmem:[#allocation2 + $0x30] sm:$0xff]
      %v602 = vld [vmem:[#allocation2 + $0x38] sm:$0xff]
      %v603 = vld [vmem:[#allocation2 + $0x40] sm:$0xff]
      %v604 = vld [vmem:[#allocation2 + $0x48] sm:$0xff]
      %v605 = vld [vmem:[#allocation2 + $0x50] sm:$0xff]
      %v606 = vld [vmem:[#allocation2 + $0x58] sm:$0xff]
      %v607 = vld [vmem:[#allocation2 + $0x60] sm:$0xff]
      %v608 = vld [vmem:[#allocation2 + $0x68] sm:$0xff]
      %v609 = vld [vmem:[#allocation2 + $0x70] sm:$0xff]
      %v610 = vld [vmem:[#allocation2 + $0x78] sm:$0xff]
      %v611 = vld [vmem:[#allocation2 + $0x80] sm:$0xff]
      %v612 = vld [vmem:[#allocation2 + $0x88] sm:$0xff]
      %v613 = vld [vmem:[%s3] sm:$0xf]
      %615 = vset.pattern.permute.xlu0 0
      %616 = vperm.xlu0 %615, %v613
      %v617 = vpop.permute.xlu0 %616
      %vm619 = vcmask 588800
      %v621 = vsel %vm619, %v594, 0
      %623 = vmatprep.subr.mxu0 %v596
      %624 = vmatpush1.msra.mxu0 %v595
      %625 = vmatprep.subr.mxu0 %v598
      %626 = vmatpush1.msra.mxu0 %v597
      %627 = vmatprep.subr.mxu0 %v600
      %628 = vmatpush1.msra.mxu0 %v599
      %629 = vmatprep.subr.mxu0 %v602
      %630 = vmatpush1.msra.mxu0 %v601
      %631 = vmatprep.subr.mxu0 %v604
      %632 = vmatpush1.msra.mxu0 %v603
      %633 = vmatprep.subr.mxu0 %v606
      %634 = vmatpush1.msra.mxu0 %v605
      %635 = vmatprep.subr.mxu0 %v608
      %636 = vmatpush1.msra.mxu0 %v607
      %637 = vmatprep.subr.mxu0 %v610
      %638 = vmatpush1.msra.mxu0 %v609
      %639 = vmatprep.subr.mxu0 %v612
      %640 = vmatpush1.msra.mxu0 %v611
      %641 = vmatprep.subr.mxu0 0.0
      %642 = vmatpush1.msra.mxu0 0.0
      %643 = vmatprep.subr.mxu0 0.0
      %644 = vmatpush1.msra.mxu0 0.0
      %645 = vmatprep.subr.mxu0 0.0
      %646 = vmatpush1.msra.mxu0 0.0
      %647 = vmatprep.subr.mxu0 0.0
      %648 = vmatpush1.msra.mxu0 0.0
      %649 = vmatprep.subr.mxu0 0.0
      %650 = vmatpush1.msra.mxu0 0.0
      %651 = vmatprep.subr.mxu0 0.0
      %652 = vmatpush1.msra.mxu0 0.0
      %653 = vmatprep.subr.mxu0 0.0
      %654 = vmatpush1.msra.mxu0 0.0
      %655 = vmatprep.subr.mxu0 0.0
      %656 = vmatpush1.msra.mxu0 0.0
      %657 = vmatprep.subr.mxu0 0.0
      %658 = vmatpush1.msra.mxu0 0.0
      %659 = vmatprep.subr.mxu0 0.0
      %660 = vmatpush1.msra.mxu0 0.0
      %661 = vmatprep.subr.mxu0 0.0
      %662 = vmatpush1.msra.mxu0 0.0
      %663 = vmatprep.subr.mxu0 0.0
      %664 = vmatpush1.msra.mxu0 0.0
      %665 = vmatprep.subr.mxu0 0.0
      %666 = vmatpush1.msra.mxu0 0.0
      %667 = vmatprep.subr.mxu0 0.0
      %668 = vmatpush1.msra.mxu0 0.0
      %669 = vmatprep.subr.mxu0 0.0
      %670 = vmatpush1.msra.mxu0 0.0
      %671 = vmatprep.subr.mxu0 0.0
      %672 = vmatpush1.msra.mxu0 0.0
      %673 = vmatprep.subr.mxu0 0.0
      %674 = vmatpush1.msra.mxu0 0.0
      %675 = vmatprep.subr.mxu0 0.0
      %676 = vmatpush1.msra.mxu0 0.0
      %677 = vmatprep.subr.mxu0 0.0
      %678 = vmatpush1.msra.mxu0 0.0
      %679 = vmatprep.subr.mxu0 0.0
      %680 = vmatpush1.msra.mxu0 0.0
      %681 = vmatprep.subr.mxu0 0.0
      %682 = vmatpush1.msra.mxu0 0.0
      %683 = vmatprep.subr.mxu0 0.0
      %684 = vmatpush1.msra.mxu0 0.0
      %685 = vmatprep.subr.mxu0 0.0
      %686 = vmatpush1.msra.mxu0 0.0
      %687 = vmatprep.mubr.f32.mxu0 0.0
      %688 = vmatmul.mubr.f32.gmra.mrb[0].mxu0 %v621
      %v689 = vpop.f32.mrb[0].mxu0
      %v690 = vadd.f32 %v617, %v689
      %v691 = vpop.f32.mrb[0].mxu0
      %v692 = vadd.f32 %v617, %v691
      %693 = vdwg.mxu0
      %v696 = vcombine.low %v690, %v692
      %698 = vst [vmem:[%s244] sm:$0xff] %v696
      %p699 = scmp.lt.s32.totalorder %s16, 1
      %s700 = scalar_select %p699, %s16, 1
      %s701 = smul.addr %s700, 2
      %s702 = smul.addr %s701, 4
      %s703 = scalar_lea.vmem %s5, %s702
      // Predicated region
      $region41: #{fam_forward.1} parent=39 // pred_check
        %p704 = pneg %p149
      $region42: #{fam_forward.1} parent=39 // pred_check_branch
        %706 = sbr.rel (%p704) target = $region44
      $region43: #{fam_forward.1} parent=39 // pred_region
        _
      $region44: #{fam_forward.1} parent=39 // pred_fallthru
        _
    $region40: #{fam_forward.1} parent=5 // pred_fallthru
      _
    %p707 = scmp.le.s32.totalorder 2, %s11
    // Predicated region
    $region45: #{fam_forward.1} parent=5 // pred_check
      %p708 = pneg %p707
    $region46: #{fam_forward.1} parent=5 // pred_check_branch
      %710 = sbr.rel (%p708) target = $region48
    $region47: #{fam_forward.1} parent=5 // pred_region
      %s711 = ssub.s32 %s11, 2
      // Predicated region
      $region49: #{fam_forward.1} parent=47 // pred_check
        %p712 = pneg %p155
      $region50: #{fam_forward.1} parent=47 // pred_check_branch
        %714 = sbr.rel (%p712) target = $region52
      $region51: #{fam_forward.1} parent=47 // pred_region
        %p715 = scmp.lt.s32.totalorder %s17, 1
        %s716 = scalar_select %p715, %s17, 1
        %s717 = smul.addr %s716, 2
        %s718 = smul.addr %s717, 4
        %s719 = scalar_lea.vmem %s5, %s718
      $region52: #{fam_forward.1} parent=47 // pred_fallthru
        _
    $region48: #{fam_forward.1} parent=5 // pred_fallthru
      _
  $region6: #{fam_forward.1} parent=0 // loop_footer
    %s15 = sadd.s32 1, %s11
  $region7: #{fam_forward.1} parent=0 // loop_footer_branch
    %10 = sbr.rel target = $region3
  $region8: #{fam_forward.1} parent=0 // loop_exit
    _

</llo_original>
